<compile_context>
chip_gen: v7x
topology: tpu7x:2x2x1
jax: 0.10.0
libtpu: 0.0.40
codegen_flags: <defaults>
</compile_context>

<pallas_src>
import functools

import jax
import jax.numpy as jnp
from jax.experimental import pallas as pl
from jax.experimental.pallas import tpu as pltpu


def _round_up(a, b):
    return (a + b - 1) // b * b


def _target_block_bytes():
    """Generation-gated x-block size.

    4 MiB on v6e/v7x (32 MiB default scoped VMEM, fast HBM: per-step overhead
    <10%); 2 MiB on v5e / unknown chips (16 MiB default scoped VMEM, slower
    HBM already amortizes the ~0.35us per-step overhead).  Double-buffered
    in+out blocks stay under every generation's default scoped VMEM limit.
    """
    try:
        kind = jax.devices()[0].device_kind.lower()
    except Exception:
        return 2 << 20
    if ("v6" in kind) or ("v7" in kind) or ("7x" in kind):
        return 4 << 20
    return 2 << 20


def _ln_kernel_plain(x_ref, g_ref, b_ref, o_ref, *, eps):
    # x_ref/o_ref: (tile_rows, dim); g_ref/b_ref: (1, dim).
    x = x_ref[...].astype(jnp.float32)
    g = g_ref[...].astype(jnp.float32)
    b = b_ref[...].astype(jnp.float32)
    mean = jnp.mean(x, axis=-1, keepdims=True)
    xc = x - mean
    var = jnp.mean(xc * xc, axis=-1, keepdims=True)
    inv = jax.lax.rsqrt(var + eps)                       # EUP rsqrt
    o_ref[...] = (xc * inv * g + b).astype(o_ref.dtype)


def _ln_kernel_packed(x_ref, g_ref, b_ref, m_ref, o_ref, *, eps, inv_dim):
    # Lane-packed path (packed_dim == 128): `pack` logical rows per physical
    # row.  Per-segment sums come from MXU matmuls against a block-diagonal
    # 0/1 matrix and arrive already broadcast across each segment's lanes, so
    # every elementwise op and the final store are fully lane-dense.
    x = x_ref[...].astype(jnp.float32)       # (tile_rows, 128)
    g = g_ref[...].astype(jnp.float32)       # (1, 128) tiled gamma
    b = b_ref[...].astype(jnp.float32)       # (1, 128) tiled beta
    m = m_ref[...]                           # (128, 128) bf16 block-diag 0/1

    def seg_sum(v):
        # Exact f32 segmented sum via two bf16 MXU passes (hi/lo split): the
        # 0/1 matrix is exact in bf16, so hi@m + lo@m reproduces the f32 sum
        # to ~2^-18 relative error regardless of the default matmul precision.
        hi = v.astype(jnp.bfloat16)
        lo = (v - hi.astype(jnp.float32)).astype(jnp.bfloat16)
        return (jnp.dot(hi, m, preferred_element_type=jnp.float32)
                + jnp.dot(lo, m, preferred_element_type=jnp.float32))

    mean = seg_sum(x) * inv_dim
    xc = x - mean
    var = seg_sum(xc * xc) * inv_dim         # two-pass centered variance
    inv = jax.lax.rsqrt(var + eps)           # EUP; lane-redundant but the EUP
                                             # slot is otherwise idle
    o_ref[...] = (xc * inv * g + b).astype(o_ref.dtype)


def layer_norm(x, gamma, beta, *, eps=1e-5):
    """Matches torch.nn.functional.layer_norm(x, x.shape[-1:], gamma, beta)."""
    orig_shape = x.shape
    dim = orig_shape[-1]
    rows = 1
    for s in orig_shape[:-1]:
        rows *= s
    if rows == 0 or dim == 0:
        return x

    itemsize = jnp.dtype(x.dtype).itemsize
    row_align = max(8, 32 // max(itemsize, 1))   # 8 f32, 16 bf16, 32 int8

    # Lane packing: lay `pack` logical rows side by side so the kernel's last
    # dim is exactly 128 (lane-dense HBM blocks and dense vst).  Only when no
    # padding is needed (rows % pack == 0) and there are enough packed rows
    # for well-aligned MXU operands — otherwise fall back to the plain path
    # (still pad/slice-free).
    pack = 1
    if dim < 128 and 128 % dim == 0:
        cand = 128 // dim
        if rows % cand == 0 and rows // cand >= 8:
            pack = cand
    packed_dim = pack * dim
    packed_rows = rows // pack

    x2 = x.reshape(packed_rows, packed_dim)      # pure row-major reshape: free

    # Row-tile sizing; VMEM footprint accounts for lane padding to 128.
    vmem_row_bytes = _round_up(packed_dim, 128) * itemsize
    tile_rows = max(1, _target_block_bytes() // vmem_row_bytes)
    tile_rows = max(row_align, (tile_rows // row_align) * row_align)
    if tile_rows >= packed_rows:
        tile_rows = packed_rows                  # single full block (always legal)
    # Target >= 4 grid steps when there is enough work (>= 2 per v7x core) so
    # the in/out DMAs stay double-buffered behind compute.
    min_steps = 4
    if packed_rows >= min_steps * row_align and pl.cdiv(packed_rows, tile_rows) < min_steps:
        tile_rows = max(row_align, _round_up(pl.cdiv(packed_rows, min_steps), row_align))

    grid = (pl.cdiv(packed_rows, tile_rows),)    # ragged last block: OOB tail reads
                                                 # are garbage, write-back is masked,
                                                 # rows are independent -> harmless

    if pack > 1:
        g2 = jnp.tile(gamma.reshape(-1), pack).reshape(1, packed_dim)
        b2 = jnp.tile(beta.reshape(-1), pack).reshape(1, packed_dim)
        seg = jnp.arange(packed_dim, dtype=jnp.int32) // dim
        blockdiag = (seg[:, None] == seg[None, :]).astype(jnp.bfloat16)
        kernel = functools.partial(_ln_kernel_packed, eps=eps, inv_dim=1.0 / dim)
        in_specs = [
            pl.BlockSpec((tile_rows, packed_dim), lambda i: (i, 0)),
            # Constant block index => gamma/beta/mask are DMA'd once, not per step.
            pl.BlockSpec((1, packed_dim), lambda i: (0, 0)),
            pl.BlockSpec((1, packed_dim), lambda i: (0, 0)),
            pl.BlockSpec((packed_dim, packed_dim), lambda i: (0, 0)),
        ]
        operands = (x2, g2, b2, blockdiag)
    else:
        g2 = gamma.reshape(1, dim)
        b2 = beta.reshape(1, dim)
        kernel = functools.partial(_ln_kernel_plain, eps=eps)
        in_specs = [
            pl.BlockSpec((tile_rows, packed_dim), lambda i: (i, 0)),
            pl.BlockSpec((1, packed_dim), lambda i: (0, 0)),
            pl.BlockSpec((1, packed_dim), lambda i: (0, 0)),
        ]
        operands = (x2, g2, b2)

    out = pl.pallas_call(
        kernel,
        out_shape=jax.ShapeDtypeStruct((packed_rows, packed_dim), x.dtype),
        grid_spec=pltpu.PrefetchScalarGridSpec(
            num_scalar_prefetch=0,
            grid=grid,
            in_specs=in_specs,
            out_specs=pl.BlockSpec((tile_rows, packed_dim), lambda i: (i, 0)),
        ),
        compiler_params=pltpu.CompilerParams(
            dimension_semantics=("parallel",),
        ),
    )(*operands)

    return out.reshape(orig_shape)


def _reference_layer_norm(x, gamma, beta, eps=1e-5):
    mean = jnp.mean(x, axis=-1, keepdims=True)
    var = jnp.mean((x - mean) ** 2, axis=-1, keepdims=True)
    return (x - mean) / jnp.sqrt(var + eps) * gamma + beta


if __name__ == "__main__":
    key = jax.random.PRNGKey(0)
    k1, k2, k3, k4, k5 = jax.random.split(key, 5)

    # Primary case from the module: (batch=2, seq=8, hidden=32),
    # gamma = ones (nn.Parameter), beta = zeros (registered buffer).
    hidden = 32
    x = jax.random.normal(k1, (2, 8, hidden), dtype=jnp.float32)
    gamma = jnp.ones((hidden,), dtype=jnp.float32)
    beta = jnp.zeros((hidden,), dtype=jnp.float32)
    y = jax.block_until_ready(layer_norm(x, gamma, beta))
    assert y.shape == x.shape
    assert jnp.allclose(y, _reference_layer_norm(x, gamma, beta),
                        atol=3e-5, rtol=3e-5), "mismatch (2,8,32)"

    # Lane-packed MXU path with a multi-step grid (rows=256, dim=32).
    x3 = jax.random.normal(k2, (4, 64, hidden), dtype=jnp.float32)
    g3 = jax.random.normal(k3, (hidden,), dtype=jnp.float32)
    b3 = jnp.full((hidden,), 0.25, dtype=jnp.float32)
    y3 = jax.block_until_ready(layer_norm(x3, g3, b3))
    assert jnp.allclose(y3, _reference_layer_norm(x3, g3, b3),
                        atol=3e-5, rtol=3e-5), "mismatch (4,64,32)"

    # Unpacked path: dim not dividing 128, odd row count, single full block.
    x2 = jax.random.normal(k4, (3, 5, 48), dtype=jnp.float32)
    g2 = jax.random.normal(k5, (48,), dtype=jnp.float32)
    b2 = jnp.linspace(-1.0, 1.0, 48, dtype=jnp.float32)
    y2 = jax.block_until_ready(layer_norm(x2, g2, b2))
    assert jnp.allclose(y2, _reference_layer_norm(x2, g2, b2),
                        atol=3e-5, rtol=3e-5), "mismatch (3,5,48)"

    # Ragged last row-block with no host pad/slice: rows=200, dim=256, grid=4.
    x4 = jax.random.normal(k1, (2, 100, 256), dtype=jnp.float32)
    g4 = jax.random.normal(k3, (256,), dtype=jnp.float32)
    b4 = jnp.zeros((256,), dtype=jnp.float32)
    y4 = jax.block_until_ready(layer_norm(x4, g4, b4))
    assert jnp.allclose(y4, _reference_layer_norm(x4, g4, b4),
                        atol=3e-5, rtol=3e-5), "mismatch (2,100,256)"

    print("KERNEL_OK")
</pallas_src>

<mosaic_0001>
module attributes {stable_mosaic.version = 11 : i64} {
  func.func @_ln_kernel_plain(%arg0: i32, %arg1: memref<16x32xf32, #tpu.memory_space<vmem>>, %arg2: memref<1x32xf32, #tpu.memory_space<vmem>>, %arg3: memref<1x32xf32, #tpu.memory_space<vmem>>, %arg4: memref<16x32xf32, #tpu.memory_space<vmem>>) attributes {dimension_semantics = [#tpu.dimension_semantics<parallel>], iteration_bounds = array<i64: 1>, scalar_prefetch = 0 : i64, scratch_operands = 0 : i64, tpu.core_type = #tpu.core_type<tc>, window_params = [{transform_indices = @transform_0, window_bounds = array<i64: 16, 32>}, {pipeline_mode = #tpu.pipeline_mode<synchronous>, transform_indices = @transform_1, window_bounds = array<i64: 1, 32>}, {pipeline_mode = #tpu.pipeline_mode<synchronous>, transform_indices = @transform_2, window_bounds = array<i64: 1, 32>}, {transform_indices = @transform_3, window_bounds = array<i64: 16, 32>}]} {
    %c0 = arith.constant 0 : index
    %c0_0 = arith.constant 0 : index
    %0 = vector.load %arg1[%c0, %c0_0] : memref<16x32xf32, #tpu.memory_space<vmem>>, vector<16x32xf32>
    %c0_1 = arith.constant 0 : index
    %c0_2 = arith.constant 0 : index
    %1 = vector.load %arg2[%c0_1, %c0_2] : memref<1x32xf32, #tpu.memory_space<vmem>>, vector<1x32xf32>
    %c0_3 = arith.constant 0 : index
    %c0_4 = arith.constant 0 : index
    %2 = vector.load %arg3[%c0_3, %c0_4] : memref<1x32xf32, #tpu.memory_space<vmem>>, vector<1x32xf32>
    %cst = arith.constant dense<0.000000e+00> : vector<16xf32>
    %3 = vector.multi_reduction <add>, %0, %cst [1] : vector<16x32xf32> to vector<16xf32>
    %4 = vector.shape_cast %3 : vector<16xf32> to vector<16x1xf32>
    %cst_5 = arith.constant 3.200000e+01 : f32
    %5 = vector.broadcast %cst_5 : f32 to vector<16x1xf32>
    %6 = arith.divf %4, %5 : vector<16x1xf32>
    %7 = vector.broadcast %6 : vector<16x1xf32> to vector<16x32xf32>
    %8 = arith.subf %0, %7 : vector<16x32xf32>
    %9 = arith.mulf %8, %8 : vector<16x32xf32>
    %cst_6 = arith.constant dense<0.000000e+00> : vector<16xf32>
    %10 = vector.multi_reduction <add>, %9, %cst_6 [1] : vector<16x32xf32> to vector<16xf32>
    %11 = vector.shape_cast %10 : vector<16xf32> to vector<16x1xf32>
    %cst_7 = arith.constant 3.200000e+01 : f32
    %12 = vector.broadcast %cst_7 : f32 to vector<16x1xf32>
    %13 = arith.divf %11, %12 : vector<16x1xf32>
    %cst_8 = arith.constant 9.99999974E-6 : f32
    %14 = vector.broadcast %cst_8 : f32 to vector<16x1xf32>
    %15 = arith.addf %13, %14 : vector<16x1xf32>
    %16 = math.rsqrt %15 : vector<16x1xf32>
    %17 = vector.broadcast %16 : vector<16x1xf32> to vector<16x32xf32>
    %18 = arith.mulf %8, %17 : vector<16x32xf32>
    %19 = vector.broadcast %1 : vector<1x32xf32> to vector<16x32xf32>
    %20 = arith.mulf %18, %19 : vector<16x32xf32>
    %21 = vector.broadcast %2 : vector<1x32xf32> to vector<16x32xf32>
    %22 = arith.addf %20, %21 : vector<16x32xf32>
    %c0_9 = arith.constant 0 : index
    %c0_10 = arith.constant 0 : index
    %23 = vector.load %arg4[%c0_9, %c0_10] : memref<16x32xf32, #tpu.memory_space<vmem>>, vector<16x32xf32>
    tpu.vector_store %arg4[%c0_9, %c0_10], %22 {strides = array<i32>} : memref<16x32xf32, #tpu.memory_space<vmem>>, vector<16x32xf32>,
    return
  }
  func.func @transform_0(%arg0: i32) -> (i32, i32) {
    %c0_i32 = arith.constant 0 : i32
    %c0_i32_0 = arith.constant 0 : i32
    return %arg0, %c0_i32 : i32, i32
  }
  func.func @transform_1(%arg0: i32) -> (i32, i32) {
    %c0_i32 = arith.constant 0 : i32
    %c0_i32_0 = arith.constant 0 : i32
    %c0_i32_1 = arith.constant 0 : i32
    return %c0_i32, %c0_i32_0 : i32, i32
  }
  func.func @transform_2(%arg0: i32) -> (i32, i32) {
    %c0_i32 = arith.constant 0 : i32
    %c0_i32_0 = arith.constant 0 : i32
    %c0_i32_1 = arith.constant 0 : i32
    return %c0_i32, %c0_i32_0 : i32, i32
  }
  func.func @transform_3(%arg0: i32) -> (i32, i32) {
    %c0_i32 = arith.constant 0 : i32
    %c0_i32_0 = arith.constant 0 : i32
    return %arg0, %c0_i32 : i32, i32
  }
}

</mosaic_0001>

<llo_original>
// kernel: tpu_custom_call.1
$region0: #{tpu_custom_call.1}
  #allocation0 [shape = 'u32[]', space=smem, size = 0x4, offset = 0x4, fixed_abs, tag = 'smem constant byte address 0x4 - core index']
  #allocation1 [shape = 'u32[144,128]{1,0:T(1,128)}', space=vmem, size = 0x12000, scoped, tag = 'internal scratch']
  %s0 = inlined_call_operand.hbm [shape: f32[16,32], index: 0, kind: input, shape index: {}]
  %s1 = inlined_call_operand.vmem [shape: f32[1,32], index: 1, kind: input, shape index: {}]
  %s2 = inlined_call_operand.vmem [shape: f32[1,32], index: 2, kind: input, shape index: {}]
  %s3 = inlined_call_operand.hbm [shape: f32[16,32], index: 3, kind: output, shape index: {}]
  %s4 = sld [smem:[#allocation0]]
  $region26: #{tpu_custom_call.1} parent=0
    _
  %s6 = ssub.s32 1, %s4
  %s7 = scalar_select 0, %s6, %s4
  $region1: #{tpu_custom_call.1} parent=0
    #allocation2 [shape = 'u8[8192]{0}', space=vmem, size = 0x2000, scoped, tag = 'input window, operand 0, single buffered']
    #allocation3 [shape = 's32[1]{0}', space=sflag, size = 0x4, scoped, tag = 'scoped memory for tpu_custom_call.1']
    #allocation4 [shape = 's32[1]{0}', space=sflag, size = 0x4, scoped, tag = 'scoped memory for tpu_custom_call.1']
    #allocation5 [shape = 'u8[8192]{0}', space=vmem, size = 0x2000, scoped, tag = 'output window, operand 0, single buffered']
    %8 = vsyncpa [#allocation3], 0
    %9 = vsyncpa [#allocation4], 0
    // Predicated region
    $region2: #{tpu_custom_call.1} parent=1 // pred_check
      _
    $region3: #{tpu_custom_call.1} parent=1 // pred_check_branch
      %11 = sbr.rel (0) target = $region5
    $region4: #{tpu_custom_call.1} parent=1 // pred_region
      %s13 = ssub.s32 256, 256
      %14 = vsyncadd [#allocation3], %s13
      %s15 = sshll.u32 [#allocation2], 4
      %s16 = int_to_ptr.vmem [resolvable:$true] %s15
      %21 = dma.hbm_to_vmem [thread:$0]  %s0, 256, %s16, [#allocation3], 128, 128, 8
    $region5: #{tpu_custom_call.1} parent=1 // pred_fallthru
      _
    // Predicated region
    $region6: #{tpu_custom_call.1} parent=1 // pred_check
      _
    $region7: #{tpu_custom_call.1} parent=1 // pred_check_branch
      %23 = sbr.rel (0) target = $region9
    $region8: #{tpu_custom_call.1} parent=1 // pred_region
      _
    $region9: #{tpu_custom_call.1} parent=1 // pred_fallthru
      _
    // Predicated region
    $region10: #{tpu_custom_call.1} parent=1 // pred_check
      _
    $region11: #{tpu_custom_call.1} parent=1 // pred_check_branch
      %25 = sbr.rel (0) target = $region13
    $region12: #{tpu_custom_call.1} parent=1 // pred_region
      _
    $region13: #{tpu_custom_call.1} parent=1 // pred_fallthru
      _
    // Predicated region
    $region14: #{tpu_custom_call.1} parent=1 // pred_check
      _
    $region15: #{tpu_custom_call.1} parent=1 // pred_check_branch
      %27 = sbr.rel (0) target = $region17
    $region16: #{tpu_custom_call.1} parent=1 // pred_region
      %28 = dma.done [#allocation3], 256
    $region17: #{tpu_custom_call.1} parent=1 // pred_fallthru
      _
    %v29 = vld [vmem:[#allocation2] sm:$0xff]
    %v30 = vld [vmem:[#allocation2 + $0x8] sm:$0xff]
    %v31 = vld [vmem:[%s1] sm:$0x1]
    %v32 = vld [vmem:[%s2] sm:$0x1]
    %vm33 = vcmask 261120
    %v34 = vsel %vm33, %v29, 0.0
    %35 = vadd.xlane.f32.xlu0 %v34
    %v36 = vpop.xlane.xlu0 %35
    %v37 = vsel %vm33, %v30, 0.0
    %38 = vadd.xlane.f32.xlu0 %v37
    %v39 = vpop.xlane.xlu0 %38
    %v40 = vrcp.pop 32.0
    %v41 = vmul.f32 %v36, %v40
    %v42 = vmul.f32 %v39, %v40
    %v43 = vsub.f32 %v29, %v41
    %v44 = vsub.f32 %v30, %v42
    %v45 = vmul.f32 %v43, %v43
    %v46 = vmul.f32 %v44, %v44
    %v47 = vsel %vm33, %v45, 0.0
    %48 = vadd.xlane.f32.xlu0 %v47
    %v49 = vpop.xlane.xlu0 %48
    %v50 = vsel %vm33, %v46, 0.0
    %51 = vadd.xlane.f32.xlu0 %v50
    %v52 = vpop.xlane.xlu0 %51
    %v53 = vmul.f32 %v49, %v40
    %v54 = vmul.f32 %v52, %v40
    %v55 = vadd.f32 %v53, 1e-05
    %v56 = vadd.f32 %v54, 1e-05
    %v57 = vrsqrt.pop %v55
    %v58 = vrsqrt.pop %v56
    %v59 = vmul.f32 %v43, %v57
    %v60 = vmul.f32 %v44, %v58
    %v62 = vlaneseq
    %v63 = vshrl.u32 %v62, 7
    %v64 = vsub.s32 0, %v63
    %v65 = vrot.slane %v31, %v64
    %v67 = vmul.f32 %v59, %v65
    %v68 = vmul.f32 %v60, %v65
    %v70 = vlaneseq
    %v71 = vshrl.u32 %v70, 7
    %v72 = vsub.s32 0, %v71
    %v73 = vrot.slane %v32, %v72
    %v75 = vadd.f32 %v67, %v73
    %v76 = vadd.f32 %v68, %v73
    %77 = vst.msk [vmem:[#allocation5] sm:$0xff] %vm33, %v75
    %78 = vst.msk [vmem:[#allocation5 + $0x8] sm:$0xff] %vm33, %v76
    // Predicated region
    $region18: #{tpu_custom_call.1} parent=1 // pred_check
      _
    $region19: #{tpu_custom_call.1} parent=1 // pred_check_branch
      %80 = sbr.rel (0) target = $region21
    $region20: #{tpu_custom_call.1} parent=1 // pred_region
      %s82 = ssub.s32 256, 256
      %83 = vsyncadd [#allocation4], %s82
      %s84 = sshll.u32 [#allocation5], 4
      %s85 = int_to_ptr.vmem [resolvable:$true] %s84
      %90 = dma.vmem_to_hbm [thread:$0]  %s85, 256, %s3, [#allocation4], 128, 128, 8
    $region21: #{tpu_custom_call.1} parent=1 // pred_fallthru
      _
    // Predicated region
    $region22: #{tpu_custom_call.1} parent=1 // pred_check
      _
    $region23: #{tpu_custom_call.1} parent=1 // pred_check_branch
      %92 = sbr.rel (0) target = $region25
    $region24: #{tpu_custom_call.1} parent=1 // pred_region
      %93 = dma.done [#allocation4], 256
    $region25: #{tpu_custom_call.1} parent=1 // pred_fallthru
      _
    %94 = vsyncpa [#allocation3], 1
    %95 = vsyncpa [#allocation4], 1

</llo_original>
